<compile_context>
chip_gen: v5e
topology: v5e:2x2
jax: 0.10.0
libtpu: 0.0.40
codegen_flags: <defaults>
</compile_context>

<pallas_src>
import math

import jax
import jax.numpy as jnp
from jax.experimental import pallas as pl
from jax.experimental.pallas import tpu as pltpu


def _round_up(n, m):
    return ((n + m - 1) // m) * m


def _mlp_kernel(x_ref, w1_ref, b1_ref, w2_ref, b2_ref, w3_ref, b3_ref, o_ref):
    # One batch tile per grid step. Three MXU matmuls (f32 accumulation) with
    # f32 bias-add + ReLU on the VPU in between.
    x = x_ref[...]
    h1 = jnp.dot(x, w1_ref[...], preferred_element_type=jnp.float32)
    h1 = jnp.maximum(h1 + b1_ref[...].astype(jnp.float32), 0.0).astype(x.dtype)
    h2 = jnp.dot(h1, w2_ref[...], preferred_element_type=jnp.float32)
    h2 = jnp.maximum(h2 + b2_ref[...].astype(jnp.float32), 0.0).astype(x.dtype)
    y = jnp.dot(h2, w3_ref[...], preferred_element_type=jnp.float32)
    o_ref[...] = (y + b3_ref[...].astype(jnp.float32)).astype(o_ref.dtype)


def _choose_batch_tile(B, *, max_tile=1024, single_step_threshold=256):
    """Auto-size the batch tile.

    Small batches (<= threshold rows): one grid step (per-env-step latency path).
    Larger batches: at least 2 grid steps so v7x can shard the batch axis across
    both TensorCores; tile capped at `max_tile` rows so double-buffered x/out
    tiles stay at a few MiB of VMEM.
    """
    Br = _round_up(B, 8)
    if Br <= single_step_threshold:
        return Br
    return min(max_tile, _round_up(pl.cdiv(Br, 2), 8))


def mlp_forward(x, params, *, batch_tile=None, lane_pad_output=None,
                compute_dtype=None):
    """3-layer MLP forward pass as a single batch-tiled Pallas TPU kernel.

    x:      (B, input_dim)
    params: dict with w1 (in,64), b1 (1,64), w2 (64,64), b2 (1,64),
            w3 (64,out), b3 (1,out)
    compute_dtype: optional operand dtype (e.g. jnp.bfloat16 on v6e/v7x).
    """
    w1, b1 = params["w1"], params["b1"]
    w2, b2 = params["w2"], params["b2"]
    w3, b3 = params["w3"], params["b3"]

    B, in_dim = x.shape
    hid = w1.shape[1]
    out_dim = w3.shape[1]

    # Optional bf16 operands; accumulation / bias / ReLU stay f32 in-kernel.
    if compute_dtype is not None:
        x = x.astype(compute_dtype)
        w1, b1 = w1.astype(compute_dtype), b1.astype(compute_dtype)
        w2, b2 = w2.astype(compute_dtype), b2.astype(compute_dtype)
        w3, b3 = w3.astype(compute_dtype), b3.astype(compute_dtype)
    dtype = x.dtype

    # Batch tile (auto-sized). Ragged last block is handled by Pallas -> no
    # wrapper-side zero-pad pass over x.
    if batch_tile is None:
        bt = _choose_batch_tile(B)
    else:
        bt = _round_up(min(batch_tile, _round_up(B, 8)), 8)
    num_steps = pl.cdiv(B, bt)

    # Output layout: lane-pad only on the tiny single-step path.
    if lane_pad_output is None:
        lane_pad_output = (num_steps == 1 and out_dim < 128)
    if lane_pad_output:
        out_cols = _round_up(out_dim, 128)
        if out_cols != out_dim:
            w3 = jnp.zeros((hid, out_cols), w3.dtype).at[:, :out_dim].set(w3)
            b3 = jnp.zeros((1, out_cols), b3.dtype).at[:, :out_dim].set(b3)
    else:
        out_cols = out_dim

    # Explicit VMEM budget: resident weights + double-buffered x/out tiles +
    # f32 activation temporaries (all lane-padded to 128), plus headroom.
    itemsize = jnp.dtype(dtype).itemsize
    lane = lambda d: _round_up(d, 128)
    sub = lambda d: _round_up(d, 8)
    weight_bytes = 2 * itemsize * (
        sub(in_dim) * lane(hid) + hid * lane(hid) + hid * lane(out_cols)
        + sub(1) * (2 * lane(hid) + lane(out_cols)))
    tile_bytes = 2 * bt * (lane(in_dim) + lane(out_cols)) * itemsize
    act_bytes = 3 * bt * max(lane(hid), lane(out_cols)) * 4
    vmem_limit = int(min(48 << 20,
                         max(16 << 20,
                             weight_bytes + tile_bytes + act_bytes + (2 << 20))))

    # Advisory cost estimate so XLA can overlap this call with surrounding ops.
    flops = 2 * B * (in_dim * hid + hid * hid + hid * out_cols)
    bytes_accessed = itemsize * (
        B * in_dim + B * out_cols
        + in_dim * hid + hid * hid + hid * out_cols + 2 * hid + out_cols)
    cost = pl.CostEstimate(flops=int(flops), transcendentals=0,
                           bytes_accessed=int(bytes_accessed))

    out = pl.pallas_call(
        _mlp_kernel,
        out_shape=jax.ShapeDtypeStruct((B, out_cols), dtype),
        grid=(num_steps,),
        in_specs=[
            pl.BlockSpec((bt, in_dim), lambda i: (i, 0)),      # x tile (pipelined)
            pl.BlockSpec((in_dim, hid), lambda i: (0, 0)),     # weights: VMEM-resident
            pl.BlockSpec((1, hid), lambda i: (0, 0)),
            pl.BlockSpec((hid, hid), lambda i: (0, 0)),
            pl.BlockSpec((1, hid), lambda i: (0, 0)),
            pl.BlockSpec((hid, out_cols), lambda i: (0, 0)),
            pl.BlockSpec((1, out_cols), lambda i: (0, 0)),
        ],
        out_specs=pl.BlockSpec((bt, out_cols), lambda i: (i, 0)),
        compiler_params=pltpu.CompilerParams(
            dimension_semantics=("parallel",),   # shard batch grid across TCs on v7x
            vmem_limit_bytes=vmem_limit,
        ),
        cost_estimate=cost,
    )(x, w1, b1, w2, b2, w3, b3)

    if lane_pad_output and out_cols != out_dim:
        out = out[:, :out_dim]
    return out


def xavier_uniform(key, fan_in, fan_out, dtype=jnp.float32):
    # Matches torch.nn.init.xavier_uniform_ (gain=1): U(-a, a),
    # a = sqrt(6 / (fan_in + fan_out)). Stored as (fan_in, fan_out).
    a = math.sqrt(6.0 / (fan_in + fan_out))
    return jax.random.uniform(key, (fan_in, fan_out), dtype, minval=-a, maxval=a)


def init_params(key, input_dim, output_dim, hidden=64, dtype=jnp.float32):
    k1, k2, k3 = jax.random.split(key, 3)
    return {
        "w1": xavier_uniform(k1, input_dim, hidden, dtype),
        "b1": jnp.zeros((1, hidden), dtype),
        "w2": xavier_uniform(k2, hidden, hidden, dtype),
        "b2": jnp.zeros((1, hidden), dtype),
        "w3": xavier_uniform(k3, hidden, output_dim, dtype),
        "b3": jnp.zeros((1, output_dim), dtype),
    }


def mlp_forward_ref(x, p):
    h1 = jax.nn.relu(x @ p["w1"] + p["b1"])
    h2 = jax.nn.relu(h1 @ p["w2"] + p["b2"])
    return h2 @ p["w3"] + p["b3"]


if __name__ == "__main__":
    # BipedalWalker-v3: observation dim 24, action dim 4.
    input_dim, output_dim = 24, 4

    key = jax.random.PRNGKey(0)
    k_params, k_x1, k_x2 = jax.random.split(key, 3)
    params = init_params(k_params, input_dim, output_dim)

    # 1) Tiny per-env-step batch: single grid step, lane-dense padded output
    #    (latency-bound path; kernel tuning can't help much here — batch envs
    #    or fuse actor+critic heads caller-side if this path matters).
    x_small = jax.random.normal(k_x1, (8, input_dim), jnp.float32)
    out_small = jax.block_until_ready(mlp_forward(x_small, params))
    ref_small = mlp_forward_ref(x_small, params)
    assert out_small.shape == (8, output_dim), out_small.shape
    assert jnp.allclose(out_small, ref_small, atol=1e-5, rtol=1e-5), (
        float(jnp.max(jnp.abs(out_small - ref_small))))

    # 2) Rollout batch, not a multiple of 8: auto-sized tile -> 2 grid steps
    #    (megacore-shardable), ragged last block (no wrapper batch pad), and
    #    the unpadded (B, 4) output written directly (no slice pass).
    x_big = jax.random.normal(k_x2, (1001, input_dim), jnp.float32)
    out_big = jax.block_until_ready(mlp_forward(x_big, params))
    ref_big = mlp_forward_ref(x_big, params)
    assert out_big.shape == (1001, output_dim), out_big.shape
    assert jnp.allclose(out_big, ref_big, atol=1e-5, rtol=1e-5), (
        float(jnp.max(jnp.abs(out_big - ref_big))))

    # 3) bf16 operand path (v6e/v7x HBM-traffic halving). Loose tolerance:
    #    activations are quantized to bf16 between layers.
    out_bf16 = jax.block_until_ready(
        mlp_forward(x_big, params, compute_dtype=jnp.bfloat16))
    assert out_bf16.shape == (1001, output_dim), out_bf16.shape
    assert float(jnp.max(jnp.abs(out_bf16.astype(jnp.float32) - ref_big))) < 0.25

    print("KERNEL_OK")
</pallas_src>

<mosaic_0001>
module attributes {stable_mosaic.version = 11 : i64} {
  func.func @_mlp_kernel(%arg0: i32, %arg1: memref<8x24xf32, #tpu.memory_space<vmem>>, %arg2: memref<24x64xf32, #tpu.memory_space<vmem>>, %arg3: memref<1x64xf32, #tpu.memory_space<vmem>>, %arg4: memref<64x64xf32, #tpu.memory_space<vmem>>, %arg5: memref<1x64xf32, #tpu.memory_space<vmem>>, %arg6: memref<64x128xf32, #tpu.memory_space<vmem>>, %arg7: memref<1x128xf32, #tpu.memory_space<vmem>>, %arg8: memref<8x128xf32, #tpu.memory_space<vmem>>) attributes {dimension_semantics = [#tpu.dimension_semantics<parallel>], iteration_bounds = array<i64: 1>, scalar_prefetch = 0 : i64, scratch_operands = 0 : i64, tpu.core_type = #tpu.core_type<tc>, window_params = [{transform_indices = @transform_0, window_bounds = array<i64: 8, 24>}, {pipeline_mode = #tpu.pipeline_mode<synchronous>, transform_indices = @transform_1, window_bounds = array<i64: 24, 64>}, {pipeline_mode = #tpu.pipeline_mode<synchronous>, transform_indices = @transform_2, window_bounds = array<i64: 1, 64>}, {pipeline_mode = #tpu.pipeline_mode<synchronous>, transform_indices = @transform_3, window_bounds = array<i64: 64, 64>}, {pipeline_mode = #tpu.pipeline_mode<synchronous>, transform_indices = @transform_4, window_bounds = array<i64: 1, 64>}, {pipeline_mode = #tpu.pipeline_mode<synchronous>, transform_indices = @transform_5, window_bounds = array<i64: 64, 128>}, {pipeline_mode = #tpu.pipeline_mode<synchronous>, transform_indices = @transform_6, window_bounds = array<i64: 1, 128>}, {transform_indices = @transform_7, window_bounds = array<i64: 8, 128>}]} {
    %c0 = arith.constant 0 : index
    %c0_0 = arith.constant 0 : index
    %0 = vector.load %arg1[%c0, %c0_0] : memref<8x24xf32, #tpu.memory_space<vmem>>, vector<8x24xf32>
    %c0_1 = arith.constant 0 : index
    %c0_2 = arith.constant 0 : index
    %1 = vector.load %arg2[%c0_1, %c0_2] : memref<24x64xf32, #tpu.memory_space<vmem>>, vector<24x64xf32>
    %cst = arith.constant dense<0.000000e+00> : vector<8x64xf32>
    %2 = tpu.matmul %0, %1, %cst {dimension_numbers = #tpu.dot_dimension_numbers<[1], [0], [0], [1], [0, 0, 1, 1], [], []>} : vector<8x24xf32>, vector<24x64xf32>, vector<8x64xf32> -> vector<8x64xf32>
    %c0_3 = arith.constant 0 : index
    %c0_4 = arith.constant 0 : index
    %3 = vector.load %arg3[%c0_3, %c0_4] : memref<1x64xf32, #tpu.memory_space<vmem>>, vector<1x64xf32>
    %4 = vector.broadcast %3 : vector<1x64xf32> to vector<8x64xf32>
    %5 = arith.addf %2, %4 : vector<8x64xf32>
    %cst_5 = arith.constant 0.000000e+00 : f32
    %6 = vector.broadcast %cst_5 : f32 to vector<8x64xf32>
    %7 = arith.maximumf %5, %6 : vector<8x64xf32>
    %c0_6 = arith.constant 0 : index
    %c0_7 = arith.constant 0 : index
    %8 = vector.load %arg4[%c0_6, %c0_7] : memref<64x64xf32, #tpu.memory_space<vmem>>, vector<64x64xf32>
    %cst_8 = arith.constant dense<0.000000e+00> : vector<8x64xf32>
    %9 = tpu.matmul %7, %8, %cst_8 {dimension_numbers = #tpu.dot_dimension_numbers<[1], [0], [0], [1], [0, 0, 1, 1], [], []>} : vector<8x64xf32>, vector<64x64xf32>, vector<8x64xf32> -> vector<8x64xf32>
    %c0_9 = arith.constant 0 : index
    %c0_10 = arith.constant 0 : index
    %10 = vector.load %arg5[%c0_9, %c0_10] : memref<1x64xf32, #tpu.memory_space<vmem>>, vector<1x64xf32>
    %11 = vector.broadcast %10 : vector<1x64xf32> to vector<8x64xf32>
    %12 = arith.addf %9, %11 : vector<8x64xf32>
    %cst_11 = arith.constant 0.000000e+00 : f32
    %13 = vector.broadcast %cst_11 : f32 to vector<8x64xf32>
    %14 = arith.maximumf %12, %13 : vector<8x64xf32>
    %c0_12 = arith.constant 0 : index
    %c0_13 = arith.constant 0 : index
    %15 = vector.load %arg6[%c0_12, %c0_13] : memref<64x128xf32, #tpu.memory_space<vmem>>, vector<64x128xf32>
    %cst_14 = arith.constant dense<0.000000e+00> : vector<8x128xf32>
    %16 = tpu.matmul %14, %15, %cst_14 {dimension_numbers = #tpu.dot_dimension_numbers<[1], [0], [0], [1], [0, 0, 1, 1], [], []>} : vector<8x64xf32>, vector<64x128xf32>, vector<8x128xf32> -> vector<8x128xf32>
    %c0_15 = arith.constant 0 : index
    %c0_16 = arith.constant 0 : index
    %17 = vector.load %arg7[%c0_15, %c0_16] : memref<1x128xf32, #tpu.memory_space<vmem>>, vector<1x128xf32>
    %18 = vector.broadcast %17 : vector<1x128xf32> to vector<8x128xf32>
    %19 = arith.addf %16, %18 : vector<8x128xf32>
    %c0_17 = arith.constant 0 : index
    %c0_18 = arith.constant 0 : index
    %20 = vector.load %arg8[%c0_17, %c0_18] : memref<8x128xf32, #tpu.memory_space<vmem>>, vector<8x128xf32>
    tpu.vector_store %arg8[%c0_17, %c0_18], %19 {strides = array<i32>} : memref<8x128xf32, #tpu.memory_space<vmem>>, vector<8x128xf32>,
    return
  }
  func.func @transform_0(%arg0: i32) -> (i32, i32) {
    %c0_i32 = arith.constant 0 : i32
    %c0_i32_0 = arith.constant 0 : i32
    return %arg0, %c0_i32 : i32, i32
  }
  func.func @transform_1(%arg0: i32) -> (i32, i32) {
    %c0_i32 = arith.constant 0 : i32
    %c0_i32_0 = arith.constant 0 : i32
    %c0_i32_1 = arith.constant 0 : i32
    return %c0_i32, %c0_i32_0 : i32, i32
  }
  func.func @transform_2(%arg0: i32) -> (i32, i32) {
    %c0_i32 = arith.constant 0 : i32
    %c0_i32_0 = arith.constant 0 : i32
    %c0_i32_1 = arith.constant 0 : i32
    return %c0_i32, %c0_i32_0 : i32, i32
  }
  func.func @transform_3(%arg0: i32) -> (i32, i32) {
    %c0_i32 = arith.constant 0 : i32
    %c0_i32_0 = arith.constant 0 : i32
    %c0_i32_1 = arith.constant 0 : i32
    return %c0_i32, %c0_i32_0 : i32, i32
  }
  func.func @transform_4(%arg0: i32) -> (i32, i32) {
    %c0_i32 = arith.constant 0 : i32
    %c0_i32_0 = arith.constant 0 : i32
    %c0_i32_1 = arith.constant 0 : i32
    return %c0_i32, %c0_i32_0 : i32, i32
  }
  func.func @transform_5(%arg0: i32) -> (i32, i32) {
    %c0_i32 = arith.constant 0 : i32
    %c0_i32_0 = arith.constant 0 : i32
    %c0_i32_1 = arith.constant 0 : i32
    return %c0_i32, %c0_i32_0 : i32, i32
  }
  func.func @transform_6(%arg0: i32) -> (i32, i32) {
    %c0_i32 = arith.constant 0 : i32
    %c0_i32_0 = arith.constant 0 : i32
    %c0_i32_1 = arith.constant 0 : i32
    return %c0_i32, %c0_i32_0 : i32, i32
  }
  func.func @transform_7(%arg0: i32) -> (i32, i32) {
    %c0_i32 = arith.constant 0 : i32
    %c0_i32_0 = arith.constant 0 : i32
    return %arg0, %c0_i32 : i32, i32
  }
}

</mosaic_0001>

<llo_original>
// kernel: tpu_custom_call.1
$region0: #{tpu_custom_call.1}
  #allocation0 [shape = 'u32[]', space=smem, size = 0x4, offset = 0x4, fixed_abs, tag = 'smem constant byte address 0x4 - core index']
  #allocation1 [shape = 'u32[72,128]{1,0:T(1,128)}', space=vmem, size = 0x9000, scoped, tag = 'internal scratch']
  %s0 = inlined_call_operand.hbm [shape: f32[8,24], index: 0, kind: input, shape index: {}]
  %s1 = inlined_call_operand.hbm [shape: f32[24,64], index: 1, kind: input, shape index: {}]
  %s2 = inlined_call_operand.vmem [shape: f32[1,64], index: 2, kind: input, shape index: {}]
  %s3 = inlined_call_operand.hbm [shape: f32[64,64], index: 3, kind: input, shape index: {}]
  %s4 = inlined_call_operand.vmem [shape: f32[1,64], index: 4, kind: input, shape index: {}]
  %s5 = inlined_call_operand.hbm [shape: f32[64,128], index: 5, kind: input, shape index: {}]
  %s6 = inlined_call_operand.vmem [shape: f32[1,128], index: 6, kind: input, shape index: {}]
  %s7 = inlined_call_operand.hbm [shape: f32[8,128], index: 7, kind: output, shape index: {}]
  %s8 = sld [smem:[#allocation0]]
  $region54: #{tpu_custom_call.1} parent=0
    _
  %s10 = ssub.s32 1, %s8
  %s11 = scalar_select 0, %s10, %s8
  $region1: #{tpu_custom_call.1} parent=0
    #allocation2 [shape = 'u8[4096]{0}', space=vmem, size = 0x1000, scoped, tag = 'input window, operand 0, single buffered']
    #allocation3 [shape = 's32[1]{0}', space=sflag, size = 0x4, scoped, tag = 'scoped memory for tpu_custom_call.1']
    #allocation4 [shape = 's32[1]{0}', space=sflag, size = 0x4, scoped, tag = 'scoped memory for tpu_custom_call.1']
    #allocation5 [shape = 'u8[12288]{0}', space=vmem, size = 0x3000, scoped, tag = 'input window, operand 1, single buffered']
    #allocation6 [shape = 's32[1]{0}', space=sflag, size = 0x4, scoped, tag = 'scoped memory for tpu_custom_call.1']
    #allocation7 [shape = 'u8[32768]{0}', space=vmem, size = 0x8000, scoped, tag = 'input window, operand 3, single buffered']
    #allocation8 [shape = 'u8[32768]{0}', space=vmem, size = 0x8000, scoped, tag = 'input window, operand 5, single buffered']
    #allocation9 [shape = 's32[1]{0}', space=sflag, size = 0x4, scoped, tag = 'scoped memory for tpu_custom_call.1']
    #allocation10 [shape = 'u8[4096]{0}', space=vmem, size = 0x1000, scoped, tag = 'output window, operand 0, single buffered']
    %12 = vsyncpa [#allocation3], 0
    %13 = vsyncpa [#allocation6], 0
    %14 = vsyncpa [#allocation9], 0
    %15 = vsyncpa [#allocation4], 0
    // Predicated region
    $region2: #{tpu_custom_call.1} parent=1 // pred_check
      _
    $region3: #{tpu_custom_call.1} parent=1 // pred_check_branch
      %17 = sbr.rel (0) target = $region5
    $region4: #{tpu_custom_call.1} parent=1 // pred_region
      %19 = vsyncadd [#allocation3], 0
      %s21 = sshll.u32 %s0, 4
      %s22 = int_to_ptr.hbm [resolvable:$true] %s21
      %s23 = sshll.u32 [#allocation2], 4
      %s24 = int_to_ptr.vmem [resolvable:$true] %s23
      %26 = dma.hbm_to_vmem [thread:$0]  %s22, 128, %s24, [#allocation3]
    $region5: #{tpu_custom_call.1} parent=1 // pred_fallthru
      _
    // Predicated region
    $region6: #{tpu_custom_call.1} parent=1 // pred_check
      _
    $region7: #{tpu_custom_call.1} parent=1 // pred_check_branch
      %28 = sbr.rel (0) target = $region9
    $region8: #{tpu_custom_call.1} parent=1 // pred_region
      %30 = vsyncadd [#allocation6], 0
      %s31 = sshll.u32 %s1, 4
      %s32 = int_to_ptr.hbm [resolvable:$true] %s31
      %s33 = sshll.u32 [#allocation5], 4
      %s34 = int_to_ptr.vmem [resolvable:$true] %s33
      %39 = dma.hbm_to_vmem [thread:$0]  %s32, 384, %s34, [#allocation6], 128, 128, 8
    $region9: #{tpu_custom_call.1} parent=1 // pred_fallthru
      _
    // Predicated region
    $region10: #{tpu_custom_call.1} parent=1 // pred_check
      _
    $region11: #{tpu_custom_call.1} parent=1 // pred_check_branch
      %41 = sbr.rel (0) target = $region13
    $region12: #{tpu_custom_call.1} parent=1 // pred_region
      _
    $region13: #{tpu_custom_call.1} parent=1 // pred_fallthru
      _
    // Predicated region
    $region14: #{tpu_custom_call.1} parent=1 // pred_check
      _
    $region15: #{tpu_custom_call.1} parent=1 // pred_check_branch
      %43 = sbr.rel (0) target = $region17
    $region16: #{tpu_custom_call.1} parent=1 // pred_region
      %45 = vsyncadd [#allocation6], 0
      %s46 = sshll.u32 %s3, 4
      %s47 = int_to_ptr.hbm [resolvable:$true] %s46
      %s48 = sshll.u32 [#allocation7], 4
      %s49 = int_to_ptr.vmem [resolvable:$true] %s48
      %54 = dma.hbm_to_vmem [thread:$0]  %s47, 1024, %s49, [#allocation6], 128, 128, 8
    $region17: #{tpu_custom_call.1} parent=1 // pred_fallthru
      _
    // Predicated region
    $region18: #{tpu_custom_call.1} parent=1 // pred_check
      _
    $region19: #{tpu_custom_call.1} parent=1 // pred_check_branch
      %56 = sbr.rel (0) target = $region21
    $region20: #{tpu_custom_call.1} parent=1 // pred_region
      _
    $region21: #{tpu_custom_call.1} parent=1 // pred_fallthru
      _
    // Predicated region
    $region22: #{tpu_custom_call.1} parent=1 // pred_check
      _
    $region23: #{tpu_custom_call.1} parent=1 // pred_check_branch
      %58 = sbr.rel (0) target = $region25
    $region24: #{tpu_custom_call.1} parent=1 // pred_region
      %60 = vsyncadd [#allocation9], 0
      %s61 = sshll.u32 %s5, 4
      %s62 = int_to_ptr.hbm [resolvable:$true] %s61
      %s63 = sshll.u32 [#allocation8], 4
      %s64 = int_to_ptr.vmem [resolvable:$true] %s63
      %69 = dma.hbm_to_vmem [thread:$0]  %s62, 1024, %s64, [#allocation9], 128, 128, 8
    $region25: #{tpu_custom_call.1} parent=1 // pred_fallthru
      _
    // Predicated region
    $region26: #{tpu_custom_call.1} parent=1 // pred_check
      _
    $region27: #{tpu_custom_call.1} parent=1 // pred_check_branch
      %71 = sbr.rel (0) target = $region29
    $region28: #{tpu_custom_call.1} parent=1 // pred_region
      _
    $region29: #{tpu_custom_call.1} parent=1 // pred_fallthru
      _
    // Predicated region
    $region30: #{tpu_custom_call.1} parent=1 // pred_check
      _
    $region31: #{tpu_custom_call.1} parent=1 // pred_check_branch
      %73 = sbr.rel (0) target = $region33
    $region32: #{tpu_custom_call.1} parent=1 // pred_region
      %75 = dma.done [#allocation3], 128
    $region33: #{tpu_custom_call.1} parent=1 // pred_fallthru
      _
    // Predicated region
    $region34: #{tpu_custom_call.1} parent=1 // pred_check
      _
    $region35: #{tpu_custom_call.1} parent=1 // pred_check_branch
      %77 = sbr.rel (0) target = $region37
    $region36: #{tpu_custom_call.1} parent=1 // pred_region
      %79 = dma.done [#allocation6], 384
    $region37: #{tpu_custom_call.1} parent=1 // pred_fallthru
      _
    // Predicated region
    $region38: #{tpu_custom_call.1} parent=1 // pred_check
      _
    $region39: #{tpu_custom_call.1} parent=1 // pred_check_branch
      %81 = sbr.rel (0) target = $region41
    $region40: #{tpu_custom_call.1} parent=1 // pred_region
      %83 = dma.done [#allocation6], 1024
    $region41: #{tpu_custom_call.1} parent=1 // pred_fallthru
      _
    // Predicated region
    $region42: #{tpu_custom_call.1} parent=1 // pred_check
      _
    $region43: #{tpu_custom_call.1} parent=1 // pred_check_branch
      %85 = sbr.rel (0) target = $region45
    $region44: #{tpu_custom_call.1} parent=1 // pred_region
      %87 = dma.done [#allocation9], 1024
    $region45: #{tpu_custom_call.1} parent=1 // pred_fallthru
      _
    %v88 = vld [vmem:[#allocation2] sm:$0xff]
    %v89 = vld [vmem:[#allocation5] sm:$0xff]
    %v90 = vld [vmem:[#allocation5 + $0x8] sm:$0xff]
    %v91 = vld [vmem:[#allocation5 + $0x10] sm:$0xff]
    %v92 = vld [vmem:[%s2] sm:$0x1]
    %v94 = vperm.slane %v92, 0
    %vm96 = vcmask 195584
    %v98 = vsel %vm96, %v88, 0
    %100 = vmatpush.msra.mxu0 0.0
    %101 = vmatpush.msra.mxu0 0.0
    %102 = vmatpush.msra.mxu0 0.0
    %103 = vmatpush.msra.mxu0 0.0
    %104 = vmatpush.msra.mxu0 0.0
    %105 = vmatpush.msra.mxu0 0.0
    %106 = vmatpush.msra.mxu0 0.0
    %107 = vmatpush.msra.mxu0 0.0
    %108 = vmatpush.msra.mxu0 0.0
    %109 = vmatpush.msra.mxu0 0.0
    %110 = vmatpush.msra.mxu0 0.0
    %111 = vmatpush.msra.mxu0 0.0
    %112 = vmatpush.msra.mxu0 0.0
    %113 = vmatpush.msra.mxu0 %v91
    %114 = vmatpush.msra.mxu0 %v90
    %115 = vmatpush.msra.mxu0 %v89
    %116 = vmatmul.f32.gmra.mxu0 %v98
    %v117 = vpop.f32.mrf.mxu0
    %v118 = vadd.f32 %v94, %v117
    %119 = vdwg.mxu0
    %v120 = vmax.f32 %v118, 0.0
    %v121 = vld [vmem:[#allocation7] sm:$0xff]
    %v122 = vld [vmem:[#allocation7 + $0x8] sm:$0xff]
    %v123 = vld [vmem:[#allocation7 + $0x10] sm:$0xff]
    %v124 = vld [vmem:[#allocation7 + $0x18] sm:$0xff]
    %v125 = vld [vmem:[#allocation7 + $0x20] sm:$0xff]
    %v126 = vld [vmem:[#allocation7 + $0x28] sm:$0xff]
    %v127 = vld [vmem:[#allocation7 + $0x30] sm:$0xff]
    %v128 = vld [vmem:[#allocation7 + $0x38] sm:$0xff]
    %v129 = vld [vmem:[%s4] sm:$0x1]
    %v131 = vperm.slane %v129, 0
    %vm133 = vcmask 523264
    %v135 = vsel %vm133, %v120, 0
    %137 = vmatpush.msra.mxu0 0.0
    %138 = vmatpush.msra.mxu0 0.0
    %139 = vmatpush.msra.mxu0 0.0
    %140 = vmatpush.msra.mxu0 0.0
    %141 = vmatpush.msra.mxu0 0.0
    %142 = vmatpush.msra.mxu0 0.0
    %143 = vmatpush.msra.mxu0 0.0
    %144 = vmatpush.msra.mxu0 0.0
    %145 = vmatpush.msra.mxu0 %v128
    %146 = vmatpush.msra.mxu0 %v127
    %147 = vmatpush.msra.mxu0 %v126
    %148 = vmatpush.msra.mxu0 %v125
    %149 = vmatpush.msra.mxu0 %v124
    %150 = vmatpush.msra.mxu0 %v123
    %151 = vmatpush.msra.mxu0 %v122
    %152 = vmatpush.msra.mxu0 %v121
    %153 = vmatmul.f32.gmra.mxu0 %v135
    %v154 = vpop.f32.mrf.mxu0
    %v155 = vadd.f32 %v131, %v154
    %156 = vdwg.mxu0
    %v157 = vmax.f32 %v155, 0.0
    %v158 = vld [vmem:[#allocation8] sm:$0xff]
    %v159 = vld [vmem:[#allocation8 + $0x8] sm:$0xff]
    %v160 = vld [vmem:[#allocation8 + $0x10] sm:$0xff]
    %v161 = vld [vmem:[#allocation8 + $0x18] sm:$0xff]
    %v162 = vld [vmem:[#allocation8 + $0x20] sm:$0xff]
    %v163 = vld [vmem:[#allocation8 + $0x28] sm:$0xff]
    %v164 = vld [vmem:[#allocation8 + $0x30] sm:$0xff]
    %v165 = vld [vmem:[#allocation8 + $0x38] sm:$0xff]
    %v166 = vld [vmem:[%s6] sm:$0x1]
    %v168 = vperm.slane %v166, 0
    %v171 = vsel %vm133, %v157, 0
    %173 = vmatpush.msra.mxu0 0.0
    %174 = vmatpush.msra.mxu0 0.0
    %175 = vmatpush.msra.mxu0 0.0
    %176 = vmatpush.msra.mxu0 0.0
    %177 = vmatpush.msra.mxu0 0.0
    %178 = vmatpush.msra.mxu0 0.0
    %179 = vmatpush.msra.mxu0 0.0
    %180 = vmatpush.msra.mxu0 0.0
    %181 = vmatpush.msra.mxu0 %v165
    %182 = vmatpush.msra.mxu0 %v164
    %183 = vmatpush.msra.mxu0 %v163
    %184 = vmatpush.msra.mxu0 %v162
    %185 = vmatpush.msra.mxu0 %v161
    %186 = vmatpush.msra.mxu0 %v160
    %187 = vmatpush.msra.mxu0 %v159
    %188 = vmatpush.msra.mxu0 %v158
    %189 = vmatmul.f32.gmra.mxu0 %v171
    %v190 = vpop.f32.mrf.mxu0
    %v191 = vadd.f32 %v168, %v190
    %192 = vdwg.mxu0
    %193 = vst [vmem:[#allocation10] sm:$0xff] %v191
    // Predicated region
    $region46: #{tpu_custom_call.1} parent=1 // pred_check
      _
    $region47: #{tpu_custom_call.1} parent=1 // pred_check_branch
      %195 = sbr.rel (0) target = $region49
    $region48: #{tpu_custom_call.1} parent=1 // pred_region
      %197 = vsyncadd [#allocation4], 0
      %s199 = sshll.u32 [#allocation10], 4
      %s200 = int_to_ptr.vmem [resolvable:$true] %s199
      %s201 = sshll.u32 %s7, 4
      %s202 = int_to_ptr.hbm [resolvable:$true] %s201
      %204 = dma.vmem_to_hbm [thread:$0]  %s200, 128, %s202, [#allocation4]
    $region49: #{tpu_custom_call.1} parent=1 // pred_fallthru
      _
    // Predicated region
    $region50: #{tpu_custom_call.1} parent=1 // pred_check
      _
    $region51: #{tpu_custom_call.1} parent=1 // pred_check_branch
      %206 = sbr.rel (0) target = $region53
    $region52: #{tpu_custom_call.1} parent=1 // pred_region
      %208 = dma.done [#allocation4], 128
    $region53: #{tpu_custom_call.1} parent=1 // pred_fallthru
      _
    %209 = vsyncpa [#allocation3], 1
    %210 = vsyncpa [#allocation6], 1
    %211 = vsyncpa [#allocation9], 1
    %212 = vsyncpa [#allocation4], 1

</llo_original>
